<compile_context>
chip_gen: v7x
topology: tpu7x:2x2x1
jax: 0.10.0
libtpu: 0.0.40
codegen_flags: <defaults>
</compile_context>

<pallas_src>
import functools

import jax
import jax.numpy as jnp
from jax.experimental import pallas as pl
from jax.experimental.pallas import tpu as pltpu

LANE = 128                         # vreg lane width
SUB = 8                            # f32 vreg sublane count
MAX_TILE_BYTES = 2 * 1024 * 1024   # combined (x + t) bytes per grid-step tile
VMEM_LIMIT_BYTES = 32 * 1024 * 1024

_SUBLANE_FLOOR = {4: 8, 2: 16, 1: 32}   # min row multiple per element size


def _cdiv(a, b):
    return -(-a // b)


def _sublane_floor(dtype) -> int:
    return _SUBLANE_FLOOR.get(jnp.dtype(dtype).itemsize, 8)


def _narrow(arr):
    """Pick the narrowest dtype we can stream through HBM; upcast in-kernel."""
    dt = jnp.dtype(arr.dtype)
    if dt == jnp.bool_:
        return arr.astype(jnp.int8)            # 1 B/elem; exact for binary masks
    if jnp.issubdtype(dt, jnp.floating):
        return arr if dt.itemsize <= 4 else arr.astype(jnp.float32)
    if jnp.issubdtype(dt, jnp.integer) and dt.itemsize <= 4:
        return arr                             # stream int8/16/32 as-is
    return arr.astype(jnp.float32)


def _pick_chunk(tr: int, sub_floor: int) -> int:
    """Largest divisor of tr that is <=128 rows and a multiple of sub_floor."""
    cap = min(tr, 128)
    for c in range(cap, sub_floor - 1, -sub_floor):
        if tr % c == 0:
            return c
    return sub_floor  # unreachable: tr is always a multiple of sub_floor


@functools.lru_cache(maxsize=1)
def _num_tensorcores() -> int:
    """Best-effort TensorCores-per-device (megacore split width)."""
    try:
        kind = jax.devices()[0].device_kind.lower()
    except Exception:
        return 1
    # Single-TensorCore generations (v5e / v6e "lite" chips): no split.
    if "lite" in kind or "v5e" in kind or "v6e" in kind:
        return 1
    return 2


def _make_dice_kernel(tr: int, chunk: int):
    """Kernel accumulating [sum(s*t), sum(s), sum(t)] into a (3,8,128) block."""
    n_chunks = tr // chunk

    def kernel(x_ref, t_ref, out_ref):
        @pl.when(pl.program_id(1) == 0)
        def _init():
            out_ref[...] = jnp.zeros_like(out_ref)

        def accum(row_start, carry):
            inter, s_sum, t_sum = carry
            x = x_ref[pl.ds(row_start, chunk), :].astype(jnp.float32)
            t = t_ref[pl.ds(row_start, chunk), :].astype(jnp.float32)
            s = jax.nn.sigmoid(x)                      # EUP; hidden under DMA
            s3 = s.reshape(chunk // SUB, SUB, LANE)
            t3 = t.reshape(chunk // SUB, SUB, LANE)
            inter = inter + jnp.sum(s3 * t3, axis=0)   # pure VPU vreg adds
            s_sum = s_sum + jnp.sum(s3, axis=0)
            t_sum = t_sum + jnp.sum(t3, axis=0)
            return inter, s_sum, t_sum

        zero = jnp.zeros((SUB, LANE), jnp.float32)
        init = (zero, zero, zero)
        if n_chunks == 1:
            inter, s_sum, t_sum = accum(0, init)
        else:
            inter, s_sum, t_sum = jax.lax.fori_loop(
                0, n_chunks,
                lambda c, carry: accum(pl.multiple_of(c * chunk, chunk), carry),
                init)

        out_ref[0] += inter
        out_ref[1] += s_sum
        out_ref[2] += t_sum

    return kernel


def dice_loss(inputs, targets, smooth=1e-5):
    """Pallas TPU implementation of DiceLoss.forward. Returns a scalar f32."""
    x = _narrow(inputs.reshape(-1))
    t = _narrow(targets.reshape(-1))
    n = x.shape[0]

    sub_floor = max(_sublane_floor(x.dtype), _sublane_floor(t.dtype))
    rows_full = n // LANE

    splits = _num_tensorcores()
    if rows_full < splits * sub_floor:
        splits = 1

    inter = jnp.float32(0.0)
    s_in = jnp.float32(0.0)
    s_tg = jnp.float32(0.0)

    n_bulk = 0
    if rows_full >= sub_floor:
        # Tile sizing: ~MAX_TILE_BYTES of combined (x + t) bytes per grid step,
        # then shrink tr so the grid covers almost all full rows (tail is at
        # most a few sub_floor rows) -- no jnp.pad, no full-array copies when
        # the flattened length is lane/tile aligned.
        bytes_per_row = (x.dtype.itemsize + t.dtype.itemsize) * LANE
        tr_cap = max(sub_floor,
                     (MAX_TILE_BYTES // bytes_per_row) // sub_floor * sub_floor)
        tiles_per_split = max(1, _cdiv(rows_full, splits * tr_cap))
        tr = rows_full // (splits * tiles_per_split) // sub_floor * sub_floor
        tr = max(sub_floor, min(tr, tr_cap))
        bulk_rows = splits * tiles_per_split * tr
        n_bulk = bulk_rows * LANE

        x_bulk = x[:n_bulk].reshape(bulk_rows, LANE)   # free when n_bulk == n
        t_bulk = t[:n_bulk].reshape(bulk_rows, LANE)

        chunk = _pick_chunk(tr, sub_floor)
        in_map = lambda s, i: (s * tiles_per_split + i, 0)

        partials = pl.pallas_call(
            _make_dice_kernel(tr, chunk),
            out_shape=jax.ShapeDtypeStruct((splits * 3, SUB, LANE), jnp.float32),
            grid_spec=pltpu.PrefetchScalarGridSpec(
                num_scalar_prefetch=0,
                grid=(splits, tiles_per_split),
                in_specs=[
                    pl.BlockSpec((tr, LANE), in_map),
                    pl.BlockSpec((tr, LANE), in_map),
                ],
                out_specs=pl.BlockSpec((3, SUB, LANE), lambda s, i: (s, 0, 0)),
            ),
            compiler_params=pltpu.CompilerParams(
                dimension_semantics=("parallel", "arbitrary"),
                vmem_limit_bytes=VMEM_LIMIT_BYTES),
        )(x_bulk, t_bulk)

        sums = jnp.sum(partials.reshape(splits, 3, SUB, LANE), axis=(0, 2, 3))
        inter, s_in, s_tg = sums[0], sums[1], sums[2]

    if n_bulk < n:
        # Tiny remainder (< splits*tr*128 elements): fused plain-jnp reduction.
        x_tail = x[n_bulk:].astype(jnp.float32)
        t_tail = t[n_bulk:].astype(jnp.float32)
        s_tail = jax.nn.sigmoid(x_tail)
        inter = inter + jnp.sum(s_tail * t_tail)
        s_in = s_in + jnp.sum(s_tail)
        s_tg = s_tg + jnp.sum(t_tail)

    dice = (2.0 * inter + smooth) / (s_in + s_tg + smooth)
    return 1.0 - dice


def dice_loss_ref(inputs, targets, smooth=1e-5):
    """Pure-JAX reference matching the PyTorch module."""
    x = jax.nn.sigmoid(inputs.astype(jnp.float32)).reshape(-1)
    t = targets.astype(jnp.float32).reshape(-1)
    inter = jnp.sum(x * t)
    dice = (2.0 * inter + smooth) / (jnp.sum(x) + jnp.sum(t) + smooth)
    return 1.0 - dice


if __name__ == "__main__":
    key = jax.random.PRNGKey(0)
    k1, k2, k3, k4, k5, k6 = jax.random.split(key, 6)

    loss_fn = jax.jit(dice_loss)

    # 1) Segmentation-style f32 logits + f32 binary mask, NCHW, lane-aligned.
    x1 = jax.random.normal(k1, (2, 4, 16, 16), dtype=jnp.float32)
    t1 = (jax.random.uniform(k2, (2, 4, 16, 16)) > 0.5).astype(jnp.float32)
    l1 = loss_fn(x1, t1)
    jax.block_until_ready(l1)
    r1 = dice_loss_ref(x1, t1)
    assert jnp.allclose(l1, r1, atol=1e-5, rtol=1e-5), (l1, r1)

    # 2) bf16, non-tile-aligned shape: exercises narrow-dtype streaming plus
    #    the bulk-kernel + wrapper-tail split (no padding, no full-array copy).
    x2 = jax.random.normal(k3, (2, 3, 33, 37), dtype=jnp.bfloat16)
    t2 = (jax.random.uniform(k4, (2, 3, 33, 37)) > 0.5).astype(jnp.bfloat16)
    l2 = loss_fn(x2, t2)
    jax.block_until_ready(l2)
    r2 = dice_loss_ref(x2, t2)
    assert jnp.allclose(l2, r2, atol=1e-4, rtol=1e-4), (l2, r2)

    # 3) f32 logits + bool mask: bool is streamed as int8 (1 B/elem) and
    #    upcast to f32 inside the kernel.
    x3 = jax.random.normal(k5, (2, 4, 32, 32), dtype=jnp.float32)
    t3 = jax.random.uniform(k6, (2, 4, 32, 32)) > 0.5
    l3 = loss_fn(x3, t3)
    jax.block_until_ready(l3)
    r3 = dice_loss_ref(x3, t3)
    assert jnp.allclose(l3, r3, atol=1e-5, rtol=1e-5), (l3, r3)

    print("KERNEL_OK")
</pallas_src>

<mosaic_0001>
module attributes {stable_mosaic.version = 11 : i64} {
  func.func @kernel(%arg0: i32, %arg1: i32, %arg2: memref<8x128xf32, #tpu.memory_space<vmem>>, %arg3: memref<8x128xf32, #tpu.memory_space<vmem>>, %arg4: memref<3x8x128xf32, #tpu.memory_space<vmem>>) attributes {dimension_semantics = [#tpu.dimension_semantics<parallel>, #tpu.dimension_semantics<arbitrary>], iteration_bounds = array<i64: 2, 1>, scalar_prefetch = 0 : i64, scratch_operands = 0 : i64, tpu.core_type = #tpu.core_type<tc>, window_params = [{transform_indices = @transform_0, window_bounds = array<i64: 8, 128>}, {transform_indices = @transform_1, window_bounds = array<i64: 8, 128>}, {transform_indices = @transform_2, window_bounds = array<i64: 3, 8, 128>}]} {
    %c0_i32 = arith.constant 0 : i32
    %0 = arith.cmpi eq, %arg1, %c0_i32 : i32
    %1 = arith.extui %0 : i1 to i32
    %c0_i32_0 = arith.constant 0 : i32
    %2 = arith.cmpi ne, %1, %c0_i32_0 : i32
    scf.if %2 {
      %cst_24 = arith.constant 0.000000e+00 : f32
      %38 = vector.broadcast %cst_24 : f32 to vector<3x8x128xf32>
      %c0_25 = arith.constant 0 : index
      %c0_26 = arith.constant 0 : index
      %c0_27 = arith.constant 0 : index
      %39 = vector.load %arg4[%c0_25, %c0_26, %c0_27] : memref<3x8x128xf32, #tpu.memory_space<vmem>>, vector<3x8x128xf32>
      tpu.vector_store %arg4[%c0_25, %c0_26, %c0_27], %38 {strides = array<i32>} : memref<3x8x128xf32, #tpu.memory_space<vmem>>, vector<3x8x128xf32>,
    } else {
    }
    %cst = arith.constant 0.000000e+00 : f32
    %3 = vector.broadcast %cst : f32 to vector<8x128xf32>
    %c0 = arith.constant 0 : index
    %c0_1 = arith.constant 0 : index
    %4 = vector.load %arg2[%c0, %c0_1] : memref<8x128xf32, #tpu.memory_space<vmem>>, vector<8x128xf32>
    %c0_2 = arith.constant 0 : index
    %c0_3 = arith.constant 0 : index
    %5 = vector.load %arg3[%c0_2, %c0_3] : memref<8x128xf32, #tpu.memory_space<vmem>>, vector<8x128xf32>
    %6 = arith.negf %4 : vector<8x128xf32>
    %7 = math.exp %6 : vector<8x128xf32>
    %cst_4 = arith.constant 1.000000e+00 : f32
    %8 = vector.broadcast %cst_4 : f32 to vector<8x128xf32>
    %9 = arith.addf %8, %7 : vector<8x128xf32>
    %10 = arith.divf %8, %9 : vector<8x128xf32>
    %11 = vector.shape_cast %10 : vector<8x128xf32> to vector<1x8x128xf32>
    %12 = vector.shape_cast %5 : vector<8x128xf32> to vector<1x8x128xf32>
    %13 = arith.mulf %11, %12 : vector<1x8x128xf32>
    %cst_5 = arith.constant dense<0.000000e+00> : vector<8x128xf32>
    %14 = vector.multi_reduction <add>, %13, %cst_5 [0] : vector<1x8x128xf32> to vector<8x128xf32>
    %15 = arith.addf %3, %14 : vector<8x128xf32>
    %cst_6 = arith.constant dense<0.000000e+00> : vector<8x128xf32>
    %16 = vector.multi_reduction <add>, %11, %cst_6 [0] : vector<1x8x128xf32> to vector<8x128xf32>
    %17 = arith.addf %3, %16 : vector<8x128xf32>
    %cst_7 = arith.constant dense<0.000000e+00> : vector<8x128xf32>
    %18 = vector.multi_reduction <add>, %12, %cst_7 [0] : vector<1x8x128xf32> to vector<8x128xf32>
    %19 = arith.addf %3, %18 : vector<8x128xf32>
    %c0_8 = arith.constant 0 : index
    %c0_9 = arith.constant 0 : index
    %c0_10 = arith.constant 0 : index
    %20 = vector.load %arg4[%c0_8, %c0_9, %c0_10] : memref<3x8x128xf32, #tpu.memory_space<vmem>>, vector<1x8x128xf32>
    %21 = vector.shape_cast %20 : vector<1x8x128xf32> to vector<8x128xf32>
    %22 = arith.addf %21, %15 : vector<8x128xf32>
    %c0_11 = arith.constant 0 : index
    %c0_12 = arith.constant 0 : index
    %c0_13 = arith.constant 0 : index
    %23 = vector.load %arg4[%c0_11, %c0_12, %c0_13] : memref<3x8x128xf32, #tpu.memory_space<vmem>>, vector<1x8x128xf32>
    %24 = vector.shape_cast %23 : vector<1x8x128xf32> to vector<8x128xf32>
    %25 = vector.shape_cast %22 : vector<8x128xf32> to vector<1x8x128xf32>
    tpu.vector_store %arg4[%c0_11, %c0_12, %c0_13], %25 {strides = array<i32>} : memref<3x8x128xf32, #tpu.memory_space<vmem>>, vector<1x8x128xf32>,
    %c1 = arith.constant 1 : index
    %c0_14 = arith.constant 0 : index
    %c0_15 = arith.constant 0 : index
    %26 = vector.load %arg4[%c1, %c0_14, %c0_15] : memref<3x8x128xf32, #tpu.memory_space<vmem>>, vector<1x8x128xf32>
    %27 = vector.shape_cast %26 : vector<1x8x128xf32> to vector<8x128xf32>
    %28 = arith.addf %27, %17 : vector<8x128xf32>
    %c1_16 = arith.constant 1 : index
    %c0_17 = arith.constant 0 : index
    %c0_18 = arith.constant 0 : index
    %29 = vector.load %arg4[%c1_16, %c0_17, %c0_18] : memref<3x8x128xf32, #tpu.memory_space<vmem>>, vector<1x8x128xf32>
    %30 = vector.shape_cast %29 : vector<1x8x128xf32> to vector<8x128xf32>
    %31 = vector.shape_cast %28 : vector<8x128xf32> to vector<1x8x128xf32>
    tpu.vector_store %arg4[%c1_16, %c0_17, %c0_18], %31 {strides = array<i32>} : memref<3x8x128xf32, #tpu.memory_space<vmem>>, vector<1x8x128xf32>,
    %c2 = arith.constant 2 : index
    %c0_19 = arith.constant 0 : index
    %c0_20 = arith.constant 0 : index
    %32 = vector.load %arg4[%c2, %c0_19, %c0_20] : memref<3x8x128xf32, #tpu.memory_space<vmem>>, vector<1x8x128xf32>
    %33 = vector.shape_cast %32 : vector<1x8x128xf32> to vector<8x128xf32>
    %34 = arith.addf %33, %19 : vector<8x128xf32>
    %c2_21 = arith.constant 2 : index
    %c0_22 = arith.constant 0 : index
    %c0_23 = arith.constant 0 : index
    %35 = vector.load %arg4[%c2_21, %c0_22, %c0_23] : memref<3x8x128xf32, #tpu.memory_space<vmem>>, vector<1x8x128xf32>
    %36 = vector.shape_cast %35 : vector<1x8x128xf32> to vector<8x128xf32>
    %37 = vector.shape_cast %34 : vector<8x128xf32> to vector<1x8x128xf32>
    tpu.vector_store %arg4[%c2_21, %c0_22, %c0_23], %37 {strides = array<i32>} : memref<3x8x128xf32, #tpu.memory_space<vmem>>, vector<1x8x128xf32>,
    return
  }
  func.func @transform_0(%arg0: i32, %arg1: i32) -> (i32, i32) {
    %c1_i32 = arith.constant 1 : i32
    %0 = arith.muli %arg0, %c1_i32 : i32
    %1 = arith.addi %0, %arg1 : i32
    %c0_i32 = arith.constant 0 : i32
    %c0_i32_0 = arith.constant 0 : i32
    return %1, %c0_i32 : i32, i32
  }
  func.func @transform_1(%arg0: i32, %arg1: i32) -> (i32, i32) {
    %c1_i32 = arith.constant 1 : i32
    %0 = arith.muli %arg0, %c1_i32 : i32
    %1 = arith.addi %0, %arg1 : i32
    %c0_i32 = arith.constant 0 : i32
    %c0_i32_0 = arith.constant 0 : i32
    return %1, %c0_i32 : i32, i32
  }
  func.func @transform_2(%arg0: i32, %arg1: i32) -> (i32, i32, i32) {
    %c0_i32 = arith.constant 0 : i32
    %c0_i32_0 = arith.constant 0 : i32
    %c0_i32_1 = arith.constant 0 : i32
    return %arg0, %c0_i32, %c0_i32_0 : i32, i32, i32
  }
}

</mosaic_0001>

<llo_original>
// kernel: dice_loss.1
$region0: #{dice_loss.1}
  #allocation0 [shape = 'u32[]', space=smem, size = 0x4, offset = 0x4, fixed_abs, tag = 'smem constant byte address 0x4 - core index']
  #allocation1 [shape = 'u32[144,128]{1,0:T(1,128)}', space=vmem, size = 0x12000, scoped, tag = 'internal scratch']
  %s0 = inlined_call_operand.vmem [shape: f32[16,128], index: 0, kind: input, shape index: {}]
  %s1 = inlined_call_operand.vmem [shape: f32[16,128], index: 1, kind: input, shape index: {}]
  %s2 = inlined_call_operand.vmem [shape: f32[6,8,128], index: 2, kind: output, shape index: {}]
  %s3 = sld [smem:[#allocation0]]
  $region45: #{dice_loss.1} parent=0
    _
  %s5 = ssub.s32 1, %s3
  %s6 = scalar_select 0, %s5, %s3
  loop: start=0, step=1, limit=4
  $region2: #{dice_loss.1} parent=0 // loop_pre_header
    _
  $region3: #{dice_loss.1} parent=0 // loop_header
    %s8 = sphi 0, %s12
    %p9 = scmp.ge.s32.totalorder %s8, 4
    %s15 = sphi 0, %s27
    %s16 = sphi 0, %s23
    %s17 = sphi 0, %s15
    %s18 = sphi 0, %s16
    %s19 = sphi 0, %s17
    %s20 = sphi 0, %s18
    %s32 = sphi 0, %s34
    %s35 = sphi 0, %s32
    %s36 = sphi 0, %s35
    %s52 = sphi 0, %s36
    %s60 = sphi 0, %s62
    %s63 = sphi 0, %s60
    %s64 = sphi 0, %s63
    %s80 = sphi 0, %s64
    %s86 = sphi 0, %s88
    %s89 = sphi 0, %s86
    %s90 = sphi 0, %s89
    %s106 = sphi 0, %s90
  $region4: #{dice_loss.1} parent=0 // loop_header_branch
    %11 = sbr.rel (%p9) target = $region8
  $region5: #{dice_loss.1} parent=0 // loop_body
    %s13 = ssub.s32 %s8, 1
    %s14 = ssub.s32 %s8, 2
    %s21 = sadd.s32 1, %s16
    %p22 = scmp.ge.s32.totalorder %s21, 1
    %s23 = scalar_select %p22, 0, %s21
    %s24 = sadd.s32 1, %s15
    %s25 = scalar_select %p22, %s24, %s15
    %p26 = scmp.ge.s32.totalorder %s25, 2
    %s27 = scalar_select %p26, 0, %s25
    %s28 = sadd.s32 %s15, %s16
    %s29 = sadd.s32 %s27, %s23
    %s30 = ssub.s32 %s28, %s29
    %p31 = scmp.eq.s32.totalorder %s30, 0
    %s33 = sadd.s32 %s32, 1
    %s34 = scalar_select %p31, %s32, %s33
    %p37 = pneg %p31
    %p38 = scmp.eq.s32.totalorder %s8, 1
    %p39 = por %p37, %p38
    %p40 = scmp.ne.s32.totalorder %s32, %s35
    %p41 = scmp.eq.s32.totalorder %s8, 0
    %p42 = por %p40, %p41
    %p43 = scmp.ne.s32.totalorder %s32, %s35
    %p44 = scmp.eq.s32.totalorder %s13, 1
    %p45 = por %p43, %p44
    %p46 = scmp.ne.s32.totalorder %s35, %s36
    %p47 = scmp.eq.s32.totalorder %s13, 0
    %p48 = por %p46, %p47
    %p49 = scmp.ne.s32.totalorder %s35, %s36
    %p50 = scmp.eq.s32.totalorder %s14, 1
    %p51 = por %p49, %p50
    %p53 = scmp.ne.s32.totalorder %s36, %s52
    %p54 = scmp.eq.s32.totalorder %s14, 0
    %p55 = por %p53, %p54
    %s56 = sadd.s32 %s15, %s16
    %s57 = sadd.s32 %s27, %s23
    %s58 = ssub.s32 %s56, %s57
    %p59 = scmp.eq.s32.totalorder %s58, 0
    %s61 = sadd.s32 %s60, 1
    %s62 = scalar_select %p59, %s60, %s61
    %p65 = pneg %p59
    %p66 = scmp.eq.s32.totalorder %s8, 1
    %p67 = por %p65, %p66
    %p68 = scmp.ne.s32.totalorder %s60, %s63
    %p69 = scmp.eq.s32.totalorder %s8, 0
    %p70 = por %p68, %p69
    %p71 = scmp.ne.s32.totalorder %s60, %s63
    %p72 = scmp.eq.s32.totalorder %s13, 1
    %p73 = por %p71, %p72
    %p74 = scmp.ne.s32.totalorder %s63, %s64
    %p75 = scmp.eq.s32.totalorder %s13, 0
    %p76 = por %p74, %p75
    %p77 = scmp.ne.s32.totalorder %s63, %s64
    %p78 = scmp.eq.s32.totalorder %s14, 1
    %p79 = por %p77, %p78
    %p81 = scmp.ne.s32.totalorder %s64, %s80
    %p82 = scmp.eq.s32.totalorder %s14, 0
    %p83 = por %p81, %p82
    %s84 = ssub.s32 %s15, %s27
    %p85 = scmp.eq.s32.totalorder %s84, 0
    %s87 = sadd.s32 %s86, 1
    %s88 = scalar_select %p85, %s86, %s87
    %p91 = pneg %p85
    %p92 = scmp.eq.s32.totalorder %s8, 1
    %p93 = por %p91, %p92
    %p94 = scmp.ne.s32.totalorder %s86, %s89
    %p95 = scmp.eq.s32.totalorder %s8, 0
    %p96 = por %p94, %p95
    %p97 = scmp.ne.s32.totalorder %s86, %s89
    %p98 = scmp.eq.s32.totalorder %s13, 1
    %p99 = por %p97, %p98
    %p100 = scmp.ne.s32.totalorder %s89, %s90
    %p101 = scmp.eq.s32.totalorder %s13, 0
    %p102 = por %p100, %p101
    %p103 = scmp.ne.s32.totalorder %s89, %s90
    %p104 = scmp.eq.s32.totalorder %s14, 1
    %p105 = por %p103, %p104
    %p107 = scmp.ne.s32.totalorder %s90, %s106
    %p108 = scmp.eq.s32.totalorder %s14, 0
    %p109 = por %p107, %p108
    %p110 = scmp.le.s32.totalorder 1, %s8
    %p111 = scmp.lt.s32.totalorder %s8, 3
    %p112 = pnand %p110, %p111
    %p113 = pneg %p112
    // Predicated region
    $region9: #{dice_loss.1} parent=5 // pred_check
      _
    $region10: #{dice_loss.1} parent=5 // pred_check_branch
      %115 = sbr.rel (%p112) target = $region12
    $region11: #{dice_loss.1} parent=5 // pred_region
      %s116 = ssub.s32 %s8, 1
    $region12: #{dice_loss.1} parent=5 // pred_fallthru
      _
    %p117 = scmp.lt.s32.totalorder %s8, 2
    // Predicated region
    $region13: #{dice_loss.1} parent=5 // pred_check
      %p118 = pneg %p117
    $region14: #{dice_loss.1} parent=5 // pred_check_branch
      %120 = sbr.rel (%p118) target = $region16
    $region15: #{dice_loss.1} parent=5 // pred_region
      // Predicated region
      $region17: #{dice_loss.1} parent=15 // pred_check
        %p121 = pneg %p42
      $region18: #{dice_loss.1} parent=15 // pred_check_branch
        %123 = sbr.rel (%p121) target = $region20
      $region19: #{dice_loss.1} parent=15 // pred_region
        %s124 = sadd.s32 %s15, %s16
        %p125 = scmp.lt.s32.totalorder %s124, 1
        %s126 = scalar_select %p125, %s124, 1
        %s127 = smul.addr %s126, 8
        %s128 = scalar_lea.vmem %s0, %s127
        %s129 = sadd.s32 %s15, %s16
      $region20: #{dice_loss.1} parent=15 // pred_fallthru
        _
      // Predicated region
      $region21: #{dice_loss.1} parent=15 // pred_check
        %p130 = pneg %p70
      $region22: #{dice_loss.1} parent=15 // pred_check_branch
        %132 = sbr.rel (%p130) target = $region24
      $region23: #{dice_loss.1} parent=15 // pred_region
        %s133 = sadd.s32 %s15, %s16
        %p134 = scmp.lt.s32.totalorder %s133, 1
        %s135 = scalar_select %p134, %s133, 1
        %s136 = smul.addr %s135, 8
        %s137 = scalar_lea.vmem %s1, %s136
        %s138 = sadd.s32 %s15, %s16
      $region24: #{dice_loss.1} parent=15 // pred_fallthru
        _
    $region16: #{dice_loss.1} parent=5 // pred_fallthru
      _
    %p139 = scmp.le.s32.totalorder 1, %s8
    %p140 = scmp.lt.s32.totalorder %s8, 3
    %p141 = pnand %p139, %p140
    %p142 = pneg %p141
    // Predicated region
    $region25: #{dice_loss.1} parent=5 // pred_check
      _
    $region26: #{dice_loss.1} parent=5 // pred_check_branch
      %144 = sbr.rel (%p141) target = $region28
    $region27: #{dice_loss.1} parent=5 // pred_region
      %s145 = ssub.s32 %s8, 1
      %s146 = sadd.s32 %s17, %s18
      %p147 = scmp.lt.s32.totalorder %s146, 1
      %s148 = scalar_select %p147, %s146, 1
      %s149 = smul.addr %s148, 8
      %s150 = scalar_lea.vmem %s0, %s149
      %p151 = pneg %p48
      %p152 = pneg %p45
      %s153 = sadd.s32 %s17, %s18
      %p154 = scmp.lt.s32.totalorder %s153, 1
      %s155 = scalar_select %p154, %s153, 1
      %s156 = smul.addr %s155, 8
      %s157 = scalar_lea.vmem %s1, %s156
      %p158 = pneg %p76
      %p159 = pneg %p73
      %p160 = pneg %p102
      %p161 = pneg %p99
      %s162 = smul.u32 3, %s17
      %p163 = scmp.lt.s32.totalorder %s162, 5
      %s164 = scalar_select %p163, %s162, 5
      %s165 = smul.addr %s164, 8
      %s166 = scalar_lea.vmem %s2, %s165
      %s167 = sadd.s32 %s17, %s18
      %p168 = scmp.lt.s32.totalorder %s167, 1
      %s169 = scalar_select %p168, %s167, 1
      %s170 = smul.addr %s169, 8
      %s171 = scalar_lea.vmem %s0, %s170
      %s172 = sadd.s32 %s17, %s18
      %s173 = sadd.s32 %s17, %s18
      %p174 = scmp.lt.s32.totalorder %s173, 1
      %s175 = scalar_select %p174, %s173, 1
      %s176 = smul.addr %s175, 8
      %s177 = scalar_lea.vmem %s1, %s176
      %s178 = sadd.s32 %s17, %s18
      %s179 = smul.u32 3, %s17
      %p180 = scmp.lt.s32.totalorder %s179, 5
      %s181 = scalar_select %p180, %s179, 5
      %s182 = smul.addr %s181, 8
      %s183 = scalar_lea.vmem %s2, %s182
      %s184 = smul.u32 3, %s17
      %p185 = scmp.eq.s32.totalorder %s18, 0
      // Predicated region
      $region29: #{dice_loss.1} parent=27 // pred_check
        %p186 = pneg %p185
      $region30: #{dice_loss.1} parent=27 // pred_check_branch
        %188 = sbr.rel (%p186) target = $region32
      $region31: #{dice_loss.1} parent=27 // pred_region
        %189 = vst [vmem:[%s183] sm:$0xff] 0.0
        %190 = vst [vmem:[%s183 + $0x8] sm:$0xff] 0.0
        %191 = vst [vmem:[%s183 + $0x10] sm:$0xff] 0.0
      $region32: #{dice_loss.1} parent=27 // pred_fallthru
        _
      %v192 = vld [vmem:[%s171] sm:$0xff]
      %v193 = vld [vmem:[%s177] sm:$0xff]
      %v194 = vxor.u32 %v192, 2147483648
      %v195 = vmul.f32 %v194, 1.442695
      %v196 = vpow.pop %v195
      %v197 = vadd.f32 %v196, 1.0
      %v198 = vrcp.pop %v197
      %v199 = vmul.f32 1.0, %v198
      %v200 = vmul.f32 %v199, %v193
      %v201 = vadd.f32 %v200, 0.0
      %v202 = vadd.f32 %v201, 0.0
      %v203 = vadd.f32 %v199, 0.0
      %v204 = vadd.f32 %v203, 0.0
      %v205 = vadd.f32 %v193, 0.0
      %v206 = vadd.f32 %v205, 0.0
      %v207 = vld [vmem:[%s183] sm:$0xff]
      %v208 = vadd.f32 %v207, %v202
      %209 = vst [vmem:[%s183] sm:$0xff] %v208
      %s210 = scalar_lea.vmem %s183, 8
      %v211 = vld [vmem:[%s210] sm:$0xff]
      %v212 = vadd.f32 %v211, %v204
      %213 = vst [vmem:[%s210] sm:$0xff] %v212
      %s214 = scalar_lea.vmem %s183, 16
      %v215 = vld [vmem:[%s214] sm:$0xff]
      %v216 = vadd.f32 %v215, %v206
      %217 = vst [vmem:[%s214] sm:$0xff] %v216
      %s218 = smul.u32 3, %s17
      %p219 = scmp.lt.s32.totalorder %s218, 5
      %s220 = scalar_select %p219, %s218, 5
      %s221 = smul.addr %s220, 8
      %s222 = scalar_lea.vmem %s2, %s221
      // Predicated region
      $region33: #{dice_loss.1} parent=27 // pred_check
        %p223 = pneg %p99
      $region34: #{dice_loss.1} parent=27 // pred_check_branch
        %225 = sbr.rel (%p223) target = $region36
      $region35: #{dice_loss.1} parent=27 // pred_region
        %s226 = smul.u32 3, %s17
      $region36: #{dice_loss.1} parent=27 // pred_fallthru
        _
    $region28: #{dice_loss.1} parent=5 // pred_fallthru
      _
    %p227 = scmp.le.s32.totalorder 2, %s8
    // Predicated region
    $region37: #{dice_loss.1} parent=5 // pred_check
      %p228 = pneg %p227
    $region38: #{dice_loss.1} parent=5 // pred_check_branch
      %230 = sbr.rel (%p228) target = $region40
    $region39: #{dice_loss.1} parent=5 // pred_region
      %s231 = ssub.s32 %s8, 2
      // Predicated region
      $region41: #{dice_loss.1} parent=39 // pred_check
        %p232 = pneg %p105
      $region42: #{dice_loss.1} parent=39 // pred_check_branch
        %234 = sbr.rel (%p232) target = $region44
      $region43: #{dice_loss.1} parent=39 // pred_region
        %s235 = smul.u32 3, %s19
        %p236 = scmp.lt.s32.totalorder %s235, 5
        %s237 = scalar_select %p236, %s235, 5
        %s238 = smul.addr %s237, 8
        %s239 = scalar_lea.vmem %s2, %s238
      $region44: #{dice_loss.1} parent=39 // pred_fallthru
        _
    $region40: #{dice_loss.1} parent=5 // pred_fallthru
      _
  $region6: #{dice_loss.1} parent=0 // loop_footer
    %s12 = sadd.s32 1, %s8
  $region7: #{dice_loss.1} parent=0 // loop_footer_branch
    %7 = sbr.rel target = $region3
  $region8: #{dice_loss.1} parent=0 // loop_exit
    _

</llo_original>
